<compile_context>
chip_gen: v5e
topology: v5e:2x2
jax: 0.10.0
libtpu: 0.0.40
codegen_flags: <defaults>
</compile_context>

<pallas_src>
import functools

import numpy as np
import jax
import jax.numpy as jnp
from jax import lax
from jax.experimental import pallas as pl
from jax.experimental.pallas import tpu as pltpu

MAX_LEN = 50          # hardcoded `max_len = torch.tensor(50)` in the PyTorch forward
MAX_LEN_P = 56        # padded to a multiple of 8 sublanes for the in-kernel slab

# Per-block output budget (bytes, single buffer).  Double-buffered this is 2x; chosen so
# even v7x (64 MiB VMEM, 32 MiB default scoped limit) has ample headroom.
_OUT_BLOCK_BUDGET_BYTES = 4 * 1024 * 1024


# ----------------------------------------------------------------------------------------
# Table construction (exact replica of the PyTorch __init__) — done once, in numpy.
# ----------------------------------------------------------------------------------------
def _build_pe_table(d_model: int, max_seq_len: int) -> np.ndarray:
    position_encoding = np.array(
        [[pos / np.power(10000, 2.0 * (j // 2) / d_model) for j in range(d_model)]
         for pos in range(max_seq_len)]
    )
    position_encoding[:, 0::2] = np.sin(position_encoding[:, 0::2])
    position_encoding[:, 1::2] = np.cos(position_encoding[:, 1::2])
    pad_row = np.zeros((1, d_model))
    return np.concatenate([pad_row, position_encoding], axis=0).astype(np.float32)


def _build_pe_slab(pe_table: np.ndarray, d_model: int) -> np.ndarray:
    """Flattened, lane-dense, sublane-padded slab of table rows 1..MAX_LEN.

    Returns f32 [1, F_pad] where F_pad = round_up(MAX_LEN_P * d_model, 128);
    row t of the original table (position t+1) lives at flat offsets [t*d_model, (t+1)*d_model).
    All padding entries are zero.
    """
    if pe_table.shape[0] < MAX_LEN + 1:
        raise ValueError(
            f"pe_table must have at least {MAX_LEN + 1} rows (got {pe_table.shape[0]}); "
            f"max_seq_len must be >= {MAX_LEN}."
        )
    padded = np.zeros((MAX_LEN_P, d_model), dtype=np.float32)
    padded[:MAX_LEN] = pe_table[1:1 + MAX_LEN]          # positions 1..50
    flat = padded.reshape(1, MAX_LEN_P * d_model)
    f = flat.shape[1]
    f_pad = ((f + 127) // 128) * 128                    # lane-dense last dim
    if f_pad != f:
        flat = np.pad(flat, ((0, 0), (0, f_pad - f)))
    return flat.astype(np.float32)


# ----------------------------------------------------------------------------------------
# Kernel: one grid step writes a [TB, F_pad] lane-dense block of the output.
# ----------------------------------------------------------------------------------------
def _pe_kernel(len_ref, pe_ref, out_ref, *, d_model: int):
    """len_ref: VMEM i32 [TB, 1]   (clamped sequence lengths for this batch block)
       pe_ref : VMEM f32 [1, F_pad] (flattened PE slab, constant across steps)
       out_ref: VMEM f32 [TB, F_pad]

    Flat index f corresponds to timestep t = f // d_model; the masked prefix copy
    out[b, t, :] = pe[t, :] * (t < len[b]) is equivalent to f < len[b] * d_model
    (valid entries form a contiguous prefix of each flattened row).
    """
    tb, f_pad = out_ref.shape
    f_idx = lax.broadcasted_iota(jnp.int32, (tb, f_pad), 1)      # lane-axis iota
    thresh = len_ref[...] * d_model                              # (TB, 1) int32
    out_ref[...] = jnp.where(f_idx < thresh, pe_ref[...], 0.0)   # (1,F) broadcast over TB


# ----------------------------------------------------------------------------------------
# Wrapper
# ----------------------------------------------------------------------------------------
def positional_encoding_forward(input_len: jax.Array,
                                pe_slab: jax.Array,
                                d_model: int) -> jax.Array:
    """input_len: int [B, 1]; pe_slab: f32 [1, F_pad] from _build_pe_slab.

    Returns f32 [B, MAX_LEN, d_model], identical to the PyTorch forward
    (lengths are clamped to [0, MAX_LEN]).
    """
    f_pad = pe_slab.shape[1]
    f_used = MAX_LEN_P * d_model
    assert f_pad >= f_used and f_pad % 128 == 0

    lens = jnp.clip(input_len.reshape(-1, 1).astype(jnp.int32), 0, MAX_LEN)   # [B, 1]
    B = lens.shape[0]

    # Batch blocking: biggest block that keeps the (double-buffered) output comfortably
    # inside VMEM on every generation (incl. v7x's 64 MiB part).  Small B -> single step.
    bytes_per_row = f_pad * 4
    max_tb = max(8, _OUT_BLOCK_BUDGET_BYTES // bytes_per_row)
    if B <= max_tb:
        tb, b_pad = B, B                      # one grid step, block == full extent
    else:
        tb = (max_tb // 8) * 8                # multiple of 8 sublanes
        b_pad = pl.cdiv(B, tb) * tb
        lens = jnp.pad(lens, ((0, b_pad - B), (0, 0)))   # padded rows: len 0 -> all zeros
    grid = (b_pad // tb,)

    out_flat = pl.pallas_call(
        functools.partial(_pe_kernel, d_model=d_model),
        out_shape=jax.ShapeDtypeStruct((b_pad, f_pad), jnp.float32),
        grid_spec=pltpu.PrefetchScalarGridSpec(
            num_scalar_prefetch=0,
            grid=grid,
            in_specs=[
                pl.BlockSpec((tb, 1), lambda i: (i, 0)),        # lengths, per batch block
                pl.BlockSpec((1, f_pad), lambda i: (0, 0)),     # PE slab, invariant
            ],
            out_specs=pl.BlockSpec((tb, f_pad), lambda i: (i, 0)),
        ),
        compiler_params=pltpu.CompilerParams(
            dimension_semantics=("parallel",),   # lets v7x shard batch blocks across 2 TCs
        ),
    )(lens, pe_slab)

    # Un-flatten / un-pad back to the PyTorch output layout [B, 50, d_model] (XLA glue).
    out = out_flat[:B, :f_used].reshape(B, MAX_LEN_P, d_model)[:, :MAX_LEN, :]
    return out


# ----------------------------------------------------------------------------------------
# Demo + correctness check
# ----------------------------------------------------------------------------------------
if __name__ == "__main__":
    d_model = 32
    max_seq_len = 64          # must be >= MAX_LEN so positions 1..50 exist in the table
    batch = 4

    pe_table_np = _build_pe_table(d_model, max_seq_len)                  # (65, 32) f32
    pe_slab = jnp.asarray(_build_pe_slab(pe_table_np, d_model))          # (1, 1792) f32

    key = jax.random.PRNGKey(0)
    input_len = jax.random.randint(key, (batch, 1), minval=1, maxval=MAX_LEN + 1,
                                   dtype=jnp.int32)                      # [B, 1]

    out = jax.block_until_ready(positional_encoding_forward(input_len, pe_slab, d_model))

    # Reference: the embedding-gather formulation, exactly as the PyTorch code does it.
    lens_np = np.asarray(input_len).reshape(-1)
    pos_idx = np.zeros((batch, MAX_LEN), dtype=np.int64)
    for b, L in enumerate(lens_np):
        pos_idx[b, :L] = np.arange(1, L + 1)
    ref = pe_table_np[pos_idx]                                           # [B, 50, d_model]

    np.testing.assert_allclose(np.asarray(out), ref, rtol=0, atol=0)
    assert out.shape == (batch, MAX_LEN, d_model) and out.dtype == jnp.float32
    print("KERNEL_OK")
</pallas_src>

<mosaic_0001>
module attributes {stable_mosaic.version = 11 : i64} {
  func.func @_pe_kernel(%arg0: i32, %arg1: memref<4x1xi32, #tpu.memory_space<vmem>>, %arg2: memref<1x1792xf32, #tpu.memory_space<vmem>>, %arg3: memref<4x1792xf32, #tpu.memory_space<vmem>>) attributes {dimension_semantics = [#tpu.dimension_semantics<parallel>], iteration_bounds = array<i64: 1>, scalar_prefetch = 0 : i64, scratch_operands = 0 : i64, tpu.core_type = #tpu.core_type<tc>, window_params = [{transform_indices = @transform_0, window_bounds = array<i64: 4, 1>}, {pipeline_mode = #tpu.pipeline_mode<synchronous>, transform_indices = @transform_1, window_bounds = array<i64: 1, 1792>}, {transform_indices = @transform_2, window_bounds = array<i64: 4, 1792>}]} {
    %0 = tpu.iota {dimensions = array<i32: 1>} : vector<4x1792xi32>
    %c0 = arith.constant 0 : index
    %c0_0 = arith.constant 0 : index
    %1 = vector.load %arg1[%c0, %c0_0] : memref<4x1xi32, #tpu.memory_space<vmem>>, vector<4x1xi32>
    %c32_i32 = arith.constant 32 : i32
    %2 = vector.broadcast %c32_i32 : i32 to vector<4x1xi32>
    %3 = arith.muli %1, %2 : vector<4x1xi32>
    %4 = vector.broadcast %3 : vector<4x1xi32> to vector<4x1792xi32>
    %5 = arith.cmpi slt, %0, %4 : vector<4x1792xi32>
    %c0_1 = arith.constant 0 : index
    %c0_2 = arith.constant 0 : index
    %6 = vector.load %arg2[%c0_1, %c0_2] : memref<1x1792xf32, #tpu.memory_space<vmem>>, vector<1x1792xf32>
    %cst = arith.constant 0.000000e+00 : f32
    %7 = vector.shape_cast %6 : vector<1x1792xf32> to vector<1x1792xf32>
    %8 = vector.broadcast %7 : vector<1x1792xf32> to vector<4x1792xf32>
    %9 = vector.broadcast %cst : f32 to vector<4x1792xf32>
    %10 = arith.select %5, %8, %9 : vector<4x1792xi1>, vector<4x1792xf32>
    %c0_3 = arith.constant 0 : index
    %c0_4 = arith.constant 0 : index
    %11 = vector.load %arg3[%c0_3, %c0_4] : memref<4x1792xf32, #tpu.memory_space<vmem>>, vector<4x1792xf32>
    tpu.vector_store %arg3[%c0_3, %c0_4], %10 {strides = array<i32>} : memref<4x1792xf32, #tpu.memory_space<vmem>>, vector<4x1792xf32>,
    return
  }
  func.func @transform_0(%arg0: i32) -> (i32, i32) {
    %c0_i32 = arith.constant 0 : i32
    %c0_i32_0 = arith.constant 0 : i32
    return %arg0, %c0_i32 : i32, i32
  }
  func.func @transform_1(%arg0: i32) -> (i32, i32) {
    %c0_i32 = arith.constant 0 : i32
    %c0_i32_0 = arith.constant 0 : i32
    %c0_i32_1 = arith.constant 0 : i32
    return %c0_i32, %c0_i32_0 : i32, i32
  }
  func.func @transform_2(%arg0: i32) -> (i32, i32) {
    %c0_i32 = arith.constant 0 : i32
    %c0_i32_0 = arith.constant 0 : i32
    return %arg0, %c0_i32 : i32, i32
  }
}

</mosaic_0001>

<llo_original>
// kernel: tpu_custom_call.1
$region0: #{tpu_custom_call.1}
  #allocation0 [shape = 'u32[]', space=smem, size = 0x4, offset = 0x4, fixed_abs, tag = 'smem constant byte address 0x4 - core index']
  #allocation1 [shape = 'u32[72,128]{1,0:T(1,128)}', space=vmem, size = 0x9000, scoped, tag = 'internal scratch']
  %s0 = inlined_call_operand.vmem [shape: s32[4,1], index: 0, kind: input, shape index: {}]
  %s1 = inlined_call_operand.hbm [shape: f32[1,1792], index: 1, kind: input, shape index: {}]
  %s2 = inlined_call_operand.hbm [shape: f32[4,1792], index: 2, kind: output, shape index: {}]
  %s3 = sld [smem:[#allocation0]]
  $region22: #{tpu_custom_call.1} parent=0
    _
  %s5 = ssub.s32 1, %s3
  %s6 = scalar_select 0, %s5, %s3
  $region1: #{tpu_custom_call.1} parent=0
    #allocation2 [shape = 'u8[7168]{0}', space=vmem, size = 0x1c00, scoped, tag = 'input window, operand 1, single buffered']
    #allocation3 [shape = 's32[1]{0}', space=sflag, size = 0x4, scoped, tag = 'scoped memory for tpu_custom_call.1']
    #allocation4 [shape = 's32[1]{0}', space=sflag, size = 0x4, scoped, tag = 'scoped memory for tpu_custom_call.1']
    #allocation5 [shape = 'u8[28672]{0}', space=vmem, size = 0x7000, scoped, tag = 'output window, operand 0, single buffered']
    %7 = vsyncpa [#allocation3], 0
    %8 = vsyncpa [#allocation4], 0
    // Predicated region
    $region2: #{tpu_custom_call.1} parent=1 // pred_check
      _
    $region3: #{tpu_custom_call.1} parent=1 // pred_check_branch
      %10 = sbr.rel (0) target = $region5
    $region4: #{tpu_custom_call.1} parent=1 // pred_region
      _
    $region5: #{tpu_custom_call.1} parent=1 // pred_fallthru
      _
    // Predicated region
    $region6: #{tpu_custom_call.1} parent=1 // pred_check
      _
    $region7: #{tpu_custom_call.1} parent=1 // pred_check_branch
      %12 = sbr.rel (0) target = $region9
    $region8: #{tpu_custom_call.1} parent=1 // pred_region
      %14 = vsyncadd [#allocation3], 0
      %s16 = sshll.u32 %s1, 4
      %s17 = int_to_ptr.hbm [resolvable:$true] %s16
      %s18 = sshll.u32 [#allocation2], 4
      %s19 = int_to_ptr.vmem [resolvable:$true] %s18
      %21 = dma.hbm_to_vmem [thread:$0]  %s17, 224, %s19, [#allocation3]
    $region9: #{tpu_custom_call.1} parent=1 // pred_fallthru
      _
    // Predicated region
    $region10: #{tpu_custom_call.1} parent=1 // pred_check
      _
    $region11: #{tpu_custom_call.1} parent=1 // pred_check_branch
      %23 = sbr.rel (0) target = $region13
    $region12: #{tpu_custom_call.1} parent=1 // pred_region
      %25 = dma.done [#allocation3], 224
    $region13: #{tpu_custom_call.1} parent=1 // pred_fallthru
      _
    %v26 = vlaneseq
    %v27 = vand.u32 %v26, 127
    %v28 = vadd.s32 %v27, 128
    %v29 = vadd.s32 %v27, 256
    %v30 = vadd.s32 %v27, 384
    %v31 = vadd.s32 %v27, 512
    %v32 = vadd.s32 %v27, 640
    %v33 = vadd.s32 %v27, 768
    %v34 = vadd.s32 %v27, 896
    %v35 = vadd.s32 %v27, 1024
    %v36 = vadd.s32 %v27, 1152
    %v37 = vadd.s32 %v27, 1280
    %v38 = vadd.s32 %v27, 1408
    %v39 = vadd.s32 %v27, 1536
    %v40 = vadd.s32 %v27, 1664
    %v41 = vld [vmem:[%s0] sm:$0xf]
    %v42 = vmul.u32 %v41, 32
    %43 = vset.pattern.permute.xlu0 0
    %44 = vperm.xlu0 %43, %v42
    %v45 = vpop.permute.xlu0 %44
    %vm46 = vcmp.lt.s32.totalorder %v27, %v45
    %vm47 = vcmp.lt.s32.totalorder %v28, %v45
    %vm48 = vcmp.lt.s32.totalorder %v29, %v45
    %vm49 = vcmp.lt.s32.totalorder %v30, %v45
    %vm50 = vcmp.lt.s32.totalorder %v31, %v45
    %vm51 = vcmp.lt.s32.totalorder %v32, %v45
    %vm52 = vcmp.lt.s32.totalorder %v33, %v45
    %vm53 = vcmp.lt.s32.totalorder %v34, %v45
    %vm54 = vcmp.lt.s32.totalorder %v35, %v45
    %vm55 = vcmp.lt.s32.totalorder %v36, %v45
    %vm56 = vcmp.lt.s32.totalorder %v37, %v45
    %vm57 = vcmp.lt.s32.totalorder %v38, %v45
    %vm58 = vcmp.lt.s32.totalorder %v39, %v45
    %vm59 = vcmp.lt.s32.totalorder %v40, %v45
    %v60 = vld [vmem:[#allocation2] sm:$0xff]
    %v61 = vld [vmem:[#allocation2 + $0x8] sm:$0x3f]
    %v64 = vperm.slane %v60, 0
    %v65 = vperm.slane %v60, 1
    %v66 = vperm.slane %v60, 2
    %v67 = vperm.slane %v60, 3
    %v68 = vperm.slane %v60, 4
    %v69 = vperm.slane %v60, 5
    %v70 = vperm.slane %v60, 6
    %v71 = vperm.slane %v60, 7
    %v72 = vperm.slane %v61, 0
    %v73 = vperm.slane %v61, 1
    %v74 = vperm.slane %v61, 2
    %v75 = vperm.slane %v61, 3
    %v76 = vperm.slane %v61, 4
    %v77 = vperm.slane %v61, 5
    %v92 = vsel %vm46, %v64, 0.0
    %v93 = vsel %vm47, %v65, 0.0
    %v94 = vsel %vm48, %v66, 0.0
    %v95 = vsel %vm49, %v67, 0.0
    %v96 = vsel %vm50, %v68, 0.0
    %v97 = vsel %vm51, %v69, 0.0
    %v98 = vsel %vm52, %v70, 0.0
    %v99 = vsel %vm53, %v71, 0.0
    %v100 = vsel %vm54, %v72, 0.0
    %v101 = vsel %vm55, %v73, 0.0
    %v102 = vsel %vm56, %v74, 0.0
    %v103 = vsel %vm57, %v75, 0.0
    %v104 = vsel %vm58, %v76, 0.0
    %v105 = vsel %vm59, %v77, 0.0
    %v120 = vrot.slane %v93, 4
    %v121 = vrot.slane %v95, 4
    %v122 = vrot.slane %v97, 4
    %v123 = vrot.slane %v99, 4
    %v124 = vrot.slane %v101, 4
    %v125 = vrot.slane %v103, 4
    %v126 = vrot.slane %v105, 4
    %vm127 = vcmask 1043456
    %v128 = vsel %vm127, %v92, %v120
    %v129 = vsel %vm127, %v94, %v121
    %v130 = vsel %vm127, %v96, %v122
    %v131 = vsel %vm127, %v98, %v123
    %v132 = vsel %vm127, %v100, %v124
    %v133 = vsel %vm127, %v102, %v125
    %v134 = vsel %vm127, %v104, %v126
    %142 = vst [vmem:[#allocation5] sm:$0xff] %v128
    %143 = vst [vmem:[#allocation5 + $0x8] sm:$0xff] %v129
    %144 = vst [vmem:[#allocation5 + $0x10] sm:$0xff] %v130
    %145 = vst [vmem:[#allocation5 + $0x18] sm:$0xff] %v131
    %146 = vst [vmem:[#allocation5 + $0x20] sm:$0xff] %v132
    %147 = vst [vmem:[#allocation5 + $0x28] sm:$0xff] %v133
    %148 = vst [vmem:[#allocation5 + $0x30] sm:$0xff] %v134
    // Predicated region
    $region14: #{tpu_custom_call.1} parent=1 // pred_check
      _
    $region15: #{tpu_custom_call.1} parent=1 // pred_check_branch
      %150 = sbr.rel (0) target = $region17
    $region16: #{tpu_custom_call.1} parent=1 // pred_region
      %152 = vsyncadd [#allocation4], 0
      %s154 = sshll.u32 [#allocation5], 4
      %s155 = int_to_ptr.vmem [resolvable:$true] %s154
      %s156 = sshll.u32 %s2, 4
      %s157 = int_to_ptr.hbm [resolvable:$true] %s156
      %159 = dma.vmem_to_hbm [thread:$0]  %s155, 896, %s157, [#allocation4]
    $region17: #{tpu_custom_call.1} parent=1 // pred_fallthru
      _
    // Predicated region
    $region18: #{tpu_custom_call.1} parent=1 // pred_check
      _
    $region19: #{tpu_custom_call.1} parent=1 // pred_check_branch
      %161 = sbr.rel (0) target = $region21
    $region20: #{tpu_custom_call.1} parent=1 // pred_region
      %163 = dma.done [#allocation4], 896
    $region21: #{tpu_custom_call.1} parent=1 // pred_fallthru
      _
    %164 = vsyncpa [#allocation3], 1
    %165 = vsyncpa [#allocation4], 1

</llo_original>
